<compile_context>
chip_gen: v6e
topology: v6e:2x2x1
jax: 0.10.0
libtpu: 0.0.40
codegen_flags: <defaults>
</compile_context>

<pallas_src>
import functools
import math

import jax
import jax.numpy as jnp
from jax.experimental import pallas as pl
from jax.experimental.pallas import tpu as pltpu


CFG = dict(
    B=2, C=3, H=16, W=16, patch=4,
    s1_embed_dim=32, n_embed=128,       # stage1 codebook size == vocab_size_img
    N=16, vocab_txt=128, vocab_img=128,
    D=128, n_heads=2, n_layers=2,
    ctx_txt=64, ctx_img=256,
)


def _layernorm(x, g, b):
    mu = jnp.mean(x, axis=-1, keepdims=True)
    var = jnp.mean(jnp.square(x - mu), axis=-1, keepdims=True)
    return (x - mu) * jax.lax.rsqrt(var + 1e-5) * g + b


# ----------------------------- stage 1: fused encoder + VQ -----------------------------

def _stage1_kernel(patch_ref, wp_ref, bp_ref, wq_ref, bq_ref, cb_ref, cbsq_ref, o_ref):
    # encoder (patchify conv as matmul) + 1x1 quant_conv, both kept in f32 (tiny).
    z = jnp.dot(patch_ref[...], wp_ref[...], preferred_element_type=jnp.float32) + bp_ref[...]
    z = jnp.dot(z, wq_ref[...], preferred_element_type=jnp.float32) + bq_ref[...]
    # transposed distances (Ke, M); the ||z||^2 term is constant per column -> argmin-invariant.
    cross_t = jax.lax.dot_general(cb_ref[...], z, (((1,), (1,)), ((), ())),
                                  preferred_element_type=jnp.float32)          # (Ke, M)
    d_t = cbsq_ref[...] - 2.0 * cross_t
    ke = d_t.shape[0]
    iota = jax.lax.broadcasted_iota(jnp.int32, d_t.shape, 0)
    dmin = jnp.min(d_t, axis=0, keepdims=True)
    # first-argmin tie-break (matches torch.argmin), result is a lane-dense (1, M) int row.
    idx = jnp.min(jnp.where(d_t <= dmin, iota, ke), axis=0, keepdims=True)
    o_ref[...] = idx.astype(jnp.int32)


def stage1_get_codes(params, images):
    """VQGAN.get_codes: encode NCHW images -> discrete code indices (B, T)."""
    # TODO(synk): the full VQGAN ResNet encoder is simplified to patchify-conv + 1x1
    # quant_conv (its source is not provided); VQ argmin semantics are preserved.
    B, C, H, W = images.shape
    p = CFG["patch"]
    Hc, Wc = H // p, W // p
    patches = images.reshape(B, C, Hc, p, Wc, p)
    patches = patches.transpose(0, 2, 4, 1, 3, 5).reshape(B * Hc * Wc, C * p * p)
    M, Kp = patches.shape
    E = CFG["s1_embed_dim"]
    Ke = CFG["n_embed"]
    cbsq = jnp.sum(params["s1_codebook"] ** 2, axis=-1).reshape(Ke, 1)

    codes = pl.pallas_call(
        _stage1_kernel,
        out_shape=jax.ShapeDtypeStruct((1, M), jnp.int32),
        grid=(1,),
        in_specs=[
            pl.BlockSpec((M, Kp), lambda i: (0, 0)),
            pl.BlockSpec((Kp, E), lambda i: (0, 0)),
            pl.BlockSpec((1, E), lambda i: (0, 0)),
            pl.BlockSpec((E, E), lambda i: (0, 0)),
            pl.BlockSpec((1, E), lambda i: (0, 0)),
            pl.BlockSpec((Ke, E), lambda i: (0, 0)),
            pl.BlockSpec((Ke, 1), lambda i: (0, 0)),
        ],
        out_specs=pl.BlockSpec((1, M), lambda i: (0, 0)),
    )(patches.astype(jnp.float32),
      params["s1_w_patch"], params["s1_b_patch"].reshape(1, E),
      params["s1_w_qc"], params["s1_b_qc"].reshape(1, E),
      params["s1_codebook"], cbsq)
    codes = jax.lax.stop_gradient(codes)                                 # .detach()
    return codes.reshape(B, Hc * Wc)


# ----------------------------- stage 2: fused transformer block -----------------------------

def _block_kernel(x_ref, ln1g_ref, ln1b_ref, wqkv_ref, bqkv_ref, wproj_ref, bproj_ref,
                  ln2g_ref, ln2b_ref, wfc_ref, bfc_ref, wout_ref, bout_ref, o_ref,
                  *, n_heads):
    x = x_ref[...]                                   # (S, D) f32 residual stream
    S, D = x.shape
    Dh = D // n_heads
    scale = 1.0 / math.sqrt(Dh)

    # ---- LN1 + QKV projection (bf16 MXU operands, f32 accumulate) ----
    h = _layernorm(x, ln1g_ref[...], ln1b_ref[...])
    qkv = jnp.dot(h.astype(jnp.bfloat16), wqkv_ref[...],
                  preferred_element_type=jnp.float32) + bqkv_ref[...]    # (S, 3D)

    # ---- causal multi-head attention, all heads in VMEM/registers ----
    row = jax.lax.broadcasted_iota(jnp.int32, (S, S), 0)
    col = jax.lax.broadcasted_iota(jnp.int32, (S, S), 1)
    causal = col <= row
    heads = []
    for hd in range(n_heads):
        q = qkv[:, hd * Dh:(hd + 1) * Dh]
        k = qkv[:, D + hd * Dh:D + (hd + 1) * Dh]
        v = qkv[:, 2 * D + hd * Dh:2 * D + (hd + 1) * Dh]
        s = jax.lax.dot_general(q.astype(jnp.bfloat16), k.astype(jnp.bfloat16),
                                (((1,), (1,)), ((), ())),
                                preferred_element_type=jnp.float32) * scale
        s = jnp.where(causal, s, jnp.float32(-1e30))
        m = jnp.max(s, axis=-1, keepdims=True)
        p = jnp.exp(s - m)
        p = p * pl.reciprocal(jnp.sum(p, axis=-1, keepdims=True), approx=True)
        heads.append(jnp.dot(p.astype(jnp.bfloat16), v.astype(jnp.bfloat16),
                             preferred_element_type=jnp.float32))
    attn = jnp.concatenate(heads, axis=-1)                               # (S, D)

    x = x + (jnp.dot(attn.astype(jnp.bfloat16), wproj_ref[...],
                     preferred_element_type=jnp.float32) + bproj_ref[...])

    # ---- LN2 + MLP ----
    h = _layernorm(x, ln2g_ref[...], ln2b_ref[...])
    h = jnp.dot(h.astype(jnp.bfloat16), wfc_ref[...],
                preferred_element_type=jnp.float32) + bfc_ref[...]
    # TODO(synk): PyTorch nn.GELU() is erf-based; Mosaic-friendly tanh approximation used.
    h = jax.nn.gelu(h, approximate=True)
    x = x + (jnp.dot(h.astype(jnp.bfloat16), wout_ref[...],
                     preferred_element_type=jnp.float32) + bout_ref[...])
    # TODO(synk): dropout layers (stochastic) are omitted.
    o_ref[...] = x


def fused_transformer_block(x, lp, n_heads):
    B, S, D = x.shape
    kern = functools.partial(_block_kernel, n_heads=n_heads)

    def full(shape):
        return pl.BlockSpec(shape, lambda b: (0, 0))

    return pl.pallas_call(
        kern,
        out_shape=jax.ShapeDtypeStruct((B, S, D), jnp.float32),
        grid=(B,),
        in_specs=[
            pl.BlockSpec((None, S, D), lambda b: (b, 0, 0)),
            full((1, D)), full((1, D)),
            full((D, 3 * D)), full((1, 3 * D)),
            full((D, D)), full((1, D)),
            full((1, D)), full((1, D)),
            full((D, 4 * D)), full((1, 4 * D)),
            full((4 * D, D)), full((1, D)),
        ],
        out_specs=pl.BlockSpec((None, S, D), lambda b: (b, 0, 0)),
        compiler_params=pltpu.CompilerParams(dimension_semantics=("parallel",)),
    )(x,
      lp["ln1_g"].reshape(1, D), lp["ln1_b"].reshape(1, D),
      lp["w_qkv"], lp["b_qkv"].reshape(1, 3 * D),
      lp["w_proj"], lp["b_proj"].reshape(1, D),
      lp["ln2_g"].reshape(1, D), lp["ln2_b"].reshape(1, D),
      lp["w_fc"], lp["b_fc"].reshape(1, 4 * D),
      lp["w_out"], lp["b_out"].reshape(1, D))


# ----------------------------- stage 2: fused final LN + heads -----------------------------

def _head_kernel(x_ref, lng_ref, lnb_ref, wtxt_ref, wimg_ref, otxt_ref, oimg_ref, *, n_txt):
    x = x_ref[...]                                    # (S, D) f32
    S = x.shape[0]
    xf = _layernorm(x, lng_ref[...], lnb_ref[...])
    txt_h = xf[:n_txt - 1]                            # tokens predicting tokens[1:]
    img_h = xf[n_txt - 1:S - 1]                       # positions predicting image codes
    # heads have no bias (skip the zeros-bias add + its DMA entirely)
    otxt_ref[...] = jnp.dot(txt_h.astype(jnp.bfloat16), wtxt_ref[...],
                            preferred_element_type=jnp.float32)
    oimg_ref[...] = jnp.dot(img_h.astype(jnp.bfloat16), wimg_ref[...],
                            preferred_element_type=jnp.float32)


def fused_head(x, params, N):
    B, S, D = x.shape
    T = S - N
    Vt = params["w_head_txt"].shape[1]
    Vi = params["w_head_img"].shape[1]
    kern = functools.partial(_head_kernel, n_txt=N)
    return pl.pallas_call(
        kern,
        out_shape=(jax.ShapeDtypeStruct((B, N - 1, Vt), jnp.float32),
                   jax.ShapeDtypeStruct((B, T, Vi), jnp.float32)),
        grid=(B,),
        in_specs=[
            pl.BlockSpec((None, S, D), lambda b: (b, 0, 0)),
            pl.BlockSpec((1, D), lambda b: (0, 0)),
            pl.BlockSpec((1, D), lambda b: (0, 0)),
            pl.BlockSpec((D, Vt), lambda b: (0, 0)),
            pl.BlockSpec((D, Vi), lambda b: (0, 0)),
        ],
        out_specs=(pl.BlockSpec((None, N - 1, Vt), lambda b: (b, 0, 0)),
                   pl.BlockSpec((None, T, Vi), lambda b: (b, 0, 0))),
        compiler_params=pltpu.CompilerParams(dimension_semantics=("parallel",)),
    )(x, params["ln_f_g"].reshape(1, D), params["ln_f_b"].reshape(1, D),
      params["w_head_txt"], params["w_head_img"])


# ----------------------------- model glue + params -----------------------------

def init_params(key):
    c = CFG
    ks = iter(jax.random.split(key, 128))
    nrm = lambda shape, s=0.02: s * jax.random.normal(next(ks), shape, jnp.float32)
    bf = lambda a: a.astype(jnp.bfloat16)             # MXU-operand weights stored in bf16
    D = c["D"]
    p = {
        # stage1 (frozen / eval in DalleTrain) -- kept in f32
        "s1_w_patch": nrm((c["C"] * c["patch"] * c["patch"], c["s1_embed_dim"])),
        "s1_b_patch": jnp.zeros((c["s1_embed_dim"],), jnp.float32),
        "s1_w_qc": nrm((c["s1_embed_dim"], c["s1_embed_dim"])),
        "s1_b_qc": jnp.zeros((c["s1_embed_dim"],), jnp.float32),
        "s1_codebook": nrm((c["n_embed"], c["s1_embed_dim"]), 1.0),
        # stage2 embeddings (gathered in XLA, residual stream stays f32)
        "tok_emb_txt": nrm((c["vocab_txt"], D)),
        "tok_emb_img": nrm((c["vocab_img"], D)),
        "pos_emb_txt": nrm((c["ctx_txt"], D)),
        "pos_emb_img": nrm((c["ctx_img"], D)),
        "ln_f_g": jnp.ones((D,), jnp.float32),
        "ln_f_b": jnp.zeros((D,), jnp.float32),
        "w_head_txt": bf(nrm((D, c["vocab_txt"]))),
        "w_head_img": bf(nrm((D, c["vocab_img"]))),
        "blocks": [],
    }
    for _ in range(c["n_layers"]):
        p["blocks"].append({
            "ln1_g": jnp.ones((D,), jnp.float32), "ln1_b": jnp.zeros((D,), jnp.float32),
            "w_qkv": bf(nrm((D, 3 * D))), "b_qkv": jnp.zeros((3 * D,), jnp.float32),
            "w_proj": bf(nrm((D, D))), "b_proj": jnp.zeros((D,), jnp.float32),
            "ln2_g": jnp.ones((D,), jnp.float32), "ln2_b": jnp.zeros((D,), jnp.float32),
            "w_fc": bf(nrm((D, 4 * D))), "b_fc": jnp.zeros((4 * D,), jnp.float32),
            "w_out": bf(nrm((4 * D, D))), "b_out": jnp.zeros((D,), jnp.float32),
        })
    return p


def stage2_forward(params, image_code, tokens, pos_images, pos_texts):
    """Transformer1d.forward -> (logits_img, logits_txt)."""
    B, T = image_code.shape
    _, N = tokens.shape

    txt = jnp.take(params["tok_emb_txt"], tokens, axis=0)
    img = jnp.take(params["tok_emb_img"], image_code, axis=0)
    txt = txt + jnp.take(params["pos_emb_txt"], pos_texts, axis=0)
    img = img + jnp.take(params["pos_emb_img"], pos_images, axis=0)
    x = jnp.concatenate([txt, img], axis=1).astype(jnp.float32)        # (B, N+T, D)

    for lp in params["blocks"]:
        x = fused_transformer_block(x, lp, CFG["n_heads"])

    logits_txt, logits_img = fused_head(x, params, N)
    return logits_img, logits_txt


def dalle_train_forward(params, images, tokens):
    """DalleTrain.forward(images, tokens) -> ((logits_img, logits_txt), image_code)."""
    B = images.shape[0]
    image_code = stage1_get_codes(params, images)                      # (B, T) int32
    _, T = image_code.shape
    _, N = tokens.shape
    # get_positional_encoding(..., mode='1d'): arange positions, broadcast over batch
    pos_texts = jnp.arange(N, dtype=jnp.int32)
    pos_images = jnp.arange(T, dtype=jnp.int32)
    logits_img, logits_txt = stage2_forward(params, image_code, tokens,
                                            pos_images, pos_texts)
    assert logits_txt.shape[:2] == (B, N - 1)
    assert logits_img.shape[:2] == (B, T)
    return (logits_img, logits_txt), image_code


# ----------------------------- main -----------------------------

if __name__ == "__main__":
    key = jax.random.PRNGKey(0)
    kp, ki, kt = jax.random.split(key, 3)
    params = init_params(kp)

    B, C, H, W = CFG["B"], CFG["C"], CFG["H"], CFG["W"]
    N = CFG["N"]
    images = jax.random.normal(ki, (B, C, H, W), jnp.float32)          # NCHW like PyTorch
    tokens = jax.random.randint(kt, (B, N), 0, CFG["vocab_txt"], jnp.int32)

    (logits_img, logits_txt), image_code = dalle_train_forward(params, images, tokens)
    jax.block_until_ready((logits_img, logits_txt, image_code))

    T = (H // CFG["patch"]) * (W // CFG["patch"])
    assert image_code.shape == (B, T) and image_code.dtype == jnp.int32
    assert logits_txt.shape == (B, N - 1, CFG["vocab_txt"])
    assert logits_img.shape == (B, T, CFG["vocab_img"])
    print("KERNEL_OK")
</pallas_src>

<mosaic_0001>
module attributes {stable_mosaic.version = 11 : i64} {
  func.func @_stage1_kernel(%arg0: i32, %arg1: memref<32x48xf32, #tpu.memory_space<vmem>>, %arg2: memref<48x32xf32, #tpu.memory_space<vmem>>, %arg3: memref<1x32xf32, #tpu.memory_space<vmem>>, %arg4: memref<32x32xf32, #tpu.memory_space<vmem>>, %arg5: memref<1x32xf32, #tpu.memory_space<vmem>>, %arg6: memref<128x32xf32, #tpu.memory_space<vmem>>, %arg7: memref<128x1xf32, #tpu.memory_space<vmem>>, %arg8: memref<1x32xi32, #tpu.memory_space<vmem>>) attributes {dimension_semantics = [#tpu.dimension_semantics<arbitrary>], iteration_bounds = array<i64: 1>, scalar_prefetch = 0 : i64, scratch_operands = 0 : i64, tpu.core_type = #tpu.core_type<tc>, window_params = [{pipeline_mode = #tpu.pipeline_mode<synchronous>, transform_indices = @transform_0, window_bounds = array<i64: 32, 48>}, {pipeline_mode = #tpu.pipeline_mode<synchronous>, transform_indices = @transform_1, window_bounds = array<i64: 48, 32>}, {pipeline_mode = #tpu.pipeline_mode<synchronous>, transform_indices = @transform_2, window_bounds = array<i64: 1, 32>}, {pipeline_mode = #tpu.pipeline_mode<synchronous>, transform_indices = @transform_3, window_bounds = array<i64: 32, 32>}, {pipeline_mode = #tpu.pipeline_mode<synchronous>, transform_indices = @transform_4, window_bounds = array<i64: 1, 32>}, {pipeline_mode = #tpu.pipeline_mode<synchronous>, transform_indices = @transform_5, window_bounds = array<i64: 128, 32>}, {pipeline_mode = #tpu.pipeline_mode<synchronous>, transform_indices = @transform_6, window_bounds = array<i64: 128, 1>}, {pipeline_mode = #tpu.pipeline_mode<synchronous>, transform_indices = @transform_7, window_bounds = array<i64: 1, 32>}]} {
    %c0 = arith.constant 0 : index
    %c0_0 = arith.constant 0 : index
    %0 = vector.load %arg1[%c0, %c0_0] : memref<32x48xf32, #tpu.memory_space<vmem>>, vector<32x48xf32>
    %c0_1 = arith.constant 0 : index
    %c0_2 = arith.constant 0 : index
    %1 = vector.load %arg2[%c0_1, %c0_2] : memref<48x32xf32, #tpu.memory_space<vmem>>, vector<48x32xf32>
    %cst = arith.constant dense<0.000000e+00> : vector<32x32xf32>
    %2 = tpu.matmul %0, %1, %cst {dimension_numbers = #tpu.dot_dimension_numbers<[1], [0], [0], [1], [0, 0, 1, 1], [], []>} : vector<32x48xf32>, vector<48x32xf32>, vector<32x32xf32> -> vector<32x32xf32>
    %c0_3 = arith.constant 0 : index
    %c0_4 = arith.constant 0 : index
    %3 = vector.load %arg3[%c0_3, %c0_4] : memref<1x32xf32, #tpu.memory_space<vmem>>, vector<1x32xf32>
    %4 = vector.broadcast %3 : vector<1x32xf32> to vector<32x32xf32>
    %5 = arith.addf %2, %4 : vector<32x32xf32>
    %c0_5 = arith.constant 0 : index
    %c0_6 = arith.constant 0 : index
    %6 = vector.load %arg4[%c0_5, %c0_6] : memref<32x32xf32, #tpu.memory_space<vmem>>, vector<32x32xf32>
    %cst_7 = arith.constant dense<0.000000e+00> : vector<32x32xf32>
    %7 = tpu.matmul %5, %6, %cst_7 {dimension_numbers = #tpu.dot_dimension_numbers<[1], [0], [0], [1], [0, 0, 1, 1], [], []>} : vector<32x32xf32>, vector<32x32xf32>, vector<32x32xf32> -> vector<32x32xf32>
    %c0_8 = arith.constant 0 : index
    %c0_9 = arith.constant 0 : index
    %8 = vector.load %arg5[%c0_8, %c0_9] : memref<1x32xf32, #tpu.memory_space<vmem>>, vector<1x32xf32>
    %9 = vector.broadcast %8 : vector<1x32xf32> to vector<32x32xf32>
    %10 = arith.addf %7, %9 : vector<32x32xf32>
    %c0_10 = arith.constant 0 : index
    %c0_11 = arith.constant 0 : index
    %11 = vector.load %arg6[%c0_10, %c0_11] : memref<128x32xf32, #tpu.memory_space<vmem>>, vector<128x32xf32>
    %cst_12 = arith.constant dense<0.000000e+00> : vector<128x32xf32>
    %12 = tpu.matmul %11, %10, %cst_12 {dimension_numbers = #tpu.dot_dimension_numbers<[1], [1], [0], [0], [0, 0, 1, 0], [], []>} : vector<128x32xf32>, vector<32x32xf32>, vector<128x32xf32> -> vector<128x32xf32>
    %c0_13 = arith.constant 0 : index
    %c0_14 = arith.constant 0 : index
    %13 = vector.load %arg7[%c0_13, %c0_14] : memref<128x1xf32, #tpu.memory_space<vmem>>, vector<128x1xf32>
    %cst_15 = arith.constant 2.000000e+00 : f32
    %14 = vector.broadcast %cst_15 : f32 to vector<128x32xf32>
    %15 = arith.mulf %14, %12 : vector<128x32xf32>
    %16 = vector.broadcast %13 : vector<128x1xf32> to vector<128x32xf32>
    %17 = arith.subf %16, %15 : vector<128x32xf32>
    %18 = tpu.iota {dimensions = array<i32: 0>} : vector<128x32xi32>
    %cst_16 = arith.constant dense<0x7F800000> : vector<32xf32>
    %19 = vector.multi_reduction <minimumf>, %17, %cst_16 [0] : vector<128x32xf32> to vector<32xf32>
    %20 = vector.shape_cast %19 : vector<32xf32> to vector<1x32xf32>
    %21 = vector.broadcast %20 : vector<1x32xf32> to vector<128x32xf32>
    %22 = arith.cmpf ole, %17, %21 : vector<128x32xf32>
    %c128_i32 = arith.constant 128 : i32
    %23 = vector.broadcast %c128_i32 : i32 to vector<128x32xi32>
    %24 = arith.select %22, %18, %23 : vector<128x32xi1>, vector<128x32xi32>
    %cst_17 = arith.constant dense<2147483647> : vector<32xi32>
    %25 = vector.multi_reduction <minsi>, %24, %cst_17 [0] : vector<128x32xi32> to vector<32xi32>
    %26 = vector.shape_cast %25 : vector<32xi32> to vector<1x32xi32>
    %c0_18 = arith.constant 0 : index
    %c0_19 = arith.constant 0 : index
    %27 = vector.load %arg8[%c0_18, %c0_19] : memref<1x32xi32, #tpu.memory_space<vmem>>, vector<1x32xi32>
    tpu.vector_store %arg8[%c0_18, %c0_19], %26 {strides = array<i32>} : memref<1x32xi32, #tpu.memory_space<vmem>>, vector<1x32xi32>,
    return
  }
  func.func @transform_0(%arg0: i32) -> (i32, i32) {
    %c0_i32 = arith.constant 0 : i32
    %c0_i32_0 = arith.constant 0 : i32
    %c0_i32_1 = arith.constant 0 : i32
    return %c0_i32, %c0_i32_0 : i32, i32
  }
  func.func @transform_1(%arg0: i32) -> (i32, i32) {
    %c0_i32 = arith.constant 0 : i32
    %c0_i32_0 = arith.constant 0 : i32
    %c0_i32_1 = arith.constant 0 : i32
    return %c0_i32, %c0_i32_0 : i32, i32
  }
  func.func @transform_2(%arg0: i32) -> (i32, i32) {
    %c0_i32 = arith.constant 0 : i32
    %c0_i32_0 = arith.constant 0 : i32
    %c0_i32_1 = arith.constant 0 : i32
    return %c0_i32, %c0_i32_0 : i32, i32
  }
  func.func @transform_3(%arg0: i32) -> (i32, i32) {
    %c0_i32 = arith.constant 0 : i32
    %c0_i32_0 = arith.constant 0 : i32
    %c0_i32_1 = arith.constant 0 : i32
    return %c0_i32, %c0_i32_0 : i32, i32
  }
  func.func @transform_4(%arg0: i32) -> (i32, i32) {
    %c0_i32 = arith.constant 0 : i32
    %c0_i32_0 = arith.constant 0 : i32
    %c0_i32_1 = arith.constant 0 : i32
    return %c0_i32, %c0_i32_0 : i32, i32
  }
  func.func @transform_5(%arg0: i32) -> (i32, i32) {
    %c0_i32 = arith.constant 0 : i32
    %c0_i32_0 = arith.constant 0 : i32
    %c0_i32_1 = arith.constant 0 : i32
    return %c0_i32, %c0_i32_0 : i32, i32
  }
  func.func @transform_6(%arg0: i32) -> (i32, i32) {
    %c0_i32 = arith.constant 0 : i32
    %c0_i32_0 = arith.constant 0 : i32
    %c0_i32_1 = arith.constant 0 : i32
    return %c0_i32, %c0_i32_0 : i32, i32
  }
  func.func @transform_7(%arg0: i32) -> (i32, i32) {
    %c0_i32 = arith.constant 0 : i32
    %c0_i32_0 = arith.constant 0 : i32
    %c0_i32_1 = arith.constant 0 : i32
    return %c0_i32, %c0_i32_0 : i32, i32
  }
}

</mosaic_0001>

<llo_original>
// kernel: tpu_custom_call.1
$region0: #{tpu_custom_call.1}
  #allocation0 [shape = 'u32[]', space=smem, size = 0x4, offset = 0x4, fixed_abs, tag = 'smem constant byte address 0x4 - core index']
  #allocation1 [shape = 'u32[144,128]{1,0:T(1,128)}', space=vmem, size = 0x12000, scoped, tag = 'internal scratch']
  %s0 = inlined_call_operand.vmem [shape: f32[32,48], index: 0, kind: input, shape index: {}]
  %s1 = inlined_call_operand.vmem [shape: f32[48,32], index: 1, kind: input, shape index: {}]
  %s2 = inlined_call_operand.vmem [shape: f32[1,32], index: 2, kind: input, shape index: {}]
  %s3 = inlined_call_operand.vmem [shape: f32[32,32], index: 3, kind: input, shape index: {}]
  %s4 = inlined_call_operand.vmem [shape: f32[1,32], index: 4, kind: input, shape index: {}]
  %s5 = inlined_call_operand.vmem [shape: f32[128,32], index: 5, kind: input, shape index: {}]
  %s6 = inlined_call_operand.vmem [shape: f32[128,1], index: 6, kind: input, shape index: {}]
  %s7 = inlined_call_operand.hbm [shape: s32[1,32], index: 7, kind: output, shape index: {}]
  %s8 = sld [smem:[#allocation0]]
  $region38: #{tpu_custom_call.1} parent=0
    _
  %s10 = ssub.s32 1, %s8
  %s11 = scalar_select 0, %s10, %s8
  $region1: #{tpu_custom_call.1} parent=0
    #allocation2 [shape = 'u8[512]{0}', space=vmem, size = 0x400, scoped, tag = 'output window, operand 0, single buffered']
    #allocation3 [shape = 's32[1]{0}', space=sflag, size = 0x4, scoped, tag = 'scoped memory for tpu_custom_call.1']
    %12 = vsyncpa [#allocation3], 0
    // Predicated region
    $region2: #{tpu_custom_call.1} parent=1 // pred_check
      _
    $region3: #{tpu_custom_call.1} parent=1 // pred_check_branch
      %14 = sbr.rel (0) target = $region5
    $region4: #{tpu_custom_call.1} parent=1 // pred_region
      _
    $region5: #{tpu_custom_call.1} parent=1 // pred_fallthru
      _
    // Predicated region
    $region6: #{tpu_custom_call.1} parent=1 // pred_check
      _
    $region7: #{tpu_custom_call.1} parent=1 // pred_check_branch
      %16 = sbr.rel (0) target = $region9
    $region8: #{tpu_custom_call.1} parent=1 // pred_region
      _
    $region9: #{tpu_custom_call.1} parent=1 // pred_fallthru
      _
    // Predicated region
    $region10: #{tpu_custom_call.1} parent=1 // pred_check
      _
    $region11: #{tpu_custom_call.1} parent=1 // pred_check_branch
      %18 = sbr.rel (0) target = $region13
    $region12: #{tpu_custom_call.1} parent=1 // pred_region
      _
    $region13: #{tpu_custom_call.1} parent=1 // pred_fallthru
      _
    // Predicated region
    $region14: #{tpu_custom_call.1} parent=1 // pred_check
      _
    $region15: #{tpu_custom_call.1} parent=1 // pred_check_branch
      %20 = sbr.rel (0) target = $region17
    $region16: #{tpu_custom_call.1} parent=1 // pred_region
      _
    $region17: #{tpu_custom_call.1} parent=1 // pred_fallthru
      _
    // Predicated region
    $region18: #{tpu_custom_call.1} parent=1 // pred_check
      _
    $region19: #{tpu_custom_call.1} parent=1 // pred_check_branch
      %22 = sbr.rel (0) target = $region21
    $region20: #{tpu_custom_call.1} parent=1 // pred_region
      _
    $region21: #{tpu_custom_call.1} parent=1 // pred_fallthru
      _
    // Predicated region
    $region22: #{tpu_custom_call.1} parent=1 // pred_check
      _
    $region23: #{tpu_custom_call.1} parent=1 // pred_check_branch
      %24 = sbr.rel (0) target = $region25
    $region24: #{tpu_custom_call.1} parent=1 // pred_region
      _
    $region25: #{tpu_custom_call.1} parent=1 // pred_fallthru
      _
    // Predicated region
    $region26: #{tpu_custom_call.1} parent=1 // pred_check
      _
    $region27: #{tpu_custom_call.1} parent=1 // pred_check_branch
      %26 = sbr.rel (0) target = $region29
    $region28: #{tpu_custom_call.1} parent=1 // pred_region
      _
    $region29: #{tpu_custom_call.1} parent=1 // pred_fallthru
      _
    %v27 = vld [vmem:[%s0] sm:$0xff]
    %v28 = vld [vmem:[%s0 + $0x8] sm:$0xff]
    %v29 = vld [vmem:[%s0 + $0x10] sm:$0xff]
    %v30 = vld [vmem:[%s0 + $0x18] sm:$0xff]
    %v31 = vld [vmem:[%s1] sm:$0xff]
    %v32 = vld [vmem:[%s1 + $0x8] sm:$0xff]
    %v33 = vld [vmem:[%s1 + $0x10] sm:$0xff]
    %v34 = vld [vmem:[%s1 + $0x18] sm:$0xff]
    %v35 = vld [vmem:[%s1 + $0x20] sm:$0xff]
    %v36 = vld [vmem:[%s1 + $0x28] sm:$0xff]
    %v37 = vld [vmem:[%s2] sm:$0x1]
    %v39 = vlaneseq
    %v40 = vshrl.u32 %v39, 7
    %v41 = vsub.s32 0, %v40
    %v42 = vrot.slane %v37, %v41
    %vm44 = vcmask 392192
    %v46 = vsel %vm44, %v27, 0
    %v49 = vsel %vm44, %v28, 0
    %v52 = vsel %vm44, %v29, 0
    %v55 = vsel %vm44, %v30, 0
    %57 = vmatprep.subr.mxu0 0.0
    %58 = vmatpush1.msra.mxu0 0.0
    %59 = vmatprep.subr.mxu0 0.0
    %60 = vmatpush1.msra.mxu0 0.0
    %61 = vmatprep.subr.mxu0 0.0
    %62 = vmatpush1.msra.mxu0 0.0
    %63 = vmatprep.subr.mxu0 0.0
    %64 = vmatpush1.msra.mxu0 0.0
    %65 = vmatprep.subr.mxu0 0.0
    %66 = vmatpush1.msra.mxu0 0.0
    %67 = vmatprep.subr.mxu0 0.0
    %68 = vmatpush1.msra.mxu0 0.0
    %69 = vmatprep.subr.mxu0 0.0
    %70 = vmatpush1.msra.mxu0 0.0
    %71 = vmatprep.subr.mxu0 0.0
    %72 = vmatpush1.msra.mxu0 0.0
    %73 = vmatprep.subr.mxu0 0.0
    %74 = vmatpush1.msra.mxu0 0.0
    %75 = vmatprep.subr.mxu0 0.0
    %76 = vmatpush1.msra.mxu0 0.0
    %77 = vmatprep.subr.mxu0 0.0
    %78 = vmatpush1.msra.mxu0 %v36
    %79 = vmatprep.subr.mxu0 0.0
    %80 = vmatpush1.msra.mxu0 %v35
    %81 = vmatprep.subr.mxu0 0.0
    %82 = vmatpush1.msra.mxu0 %v34
    %83 = vmatprep.subr.mxu0 0.0
    %84 = vmatpush1.msra.mxu0 %v33
    %85 = vmatprep.subr.mxu0 0.0
    %86 = vmatpush1.msra.mxu0 %v32
    %87 = vmatprep.subr.mxu0 0.0
    %88 = vmatpush1.msra.mxu0 %v31
    %89 = vmatprep.subr.mxu0 0.0
    %90 = vmatpush2.msra.mxu0 0.0
    %91 = vmatprep.subr.mxu0 0.0
    %92 = vmatpush2.msra.mxu0 0.0
    %93 = vmatprep.subr.mxu0 0.0
    %94 = vmatpush2.msra.mxu0 0.0
    %95 = vmatprep.subr.mxu0 0.0
    %96 = vmatpush2.msra.mxu0 0.0
    %97 = vmatprep.subr.mxu0 0.0
    %98 = vmatpush2.msra.mxu0 0.0
    %99 = vmatprep.subr.mxu0 0.0
    %100 = vmatpush2.msra.mxu0 0.0
    %101 = vmatprep.subr.mxu0 0.0
    %102 = vmatpush2.msra.mxu0 0.0
    %103 = vmatprep.subr.mxu0 0.0
    %104 = vmatpush2.msra.mxu0 0.0
    %105 = vmatprep.subr.mxu0 0.0
    %106 = vmatpush2.msra.mxu0 0.0
    %107 = vmatprep.subr.mxu0 0.0
    %108 = vmatpush2.msra.mxu0 0.0
    %109 = vmatprep.subr.mxu0 0.0
    %110 = vmatpush2.msra.mxu0 0.0
    %111 = vmatprep.subr.mxu0 0.0
    %112 = vmatpush2.msra.mxu0 0.0
    %113 = vmatprep.subr.mxu0 0.0
    %114 = vmatpush2.msra.mxu0 0.0
    %115 = vmatprep.subr.mxu0 0.0
    %116 = vmatpush2.msra.mxu0 0.0
    %117 = vmatprep.subr.mxu0 0.0
    %118 = vmatpush2.msra.mxu0 0.0
    %119 = vmatprep.subr.mxu0 0.0
    %120 = vmatpush2.msra.mxu0 0.0
    %121 = vmatprep.mubr.f32.mxu0 0.0
    %122 = vmatmul.mubr.f32.gmra.mxu0 %v46
    %v123 = vpop.f32.mrf.mxu0
    %v124 = vadd.f32 %v42, %v123
    %v125 = vpop.f32.mrf.mxu0
    %126 = vmatprep.mubr.f32.mxu0 0.0
    %127 = vmatmul.mubr.f32.gmra.mxu0 %v49
    %v128 = vpop.f32.mrf.mxu0
    %v129 = vadd.f32 %v42, %v128
    %v130 = vpop.f32.mrf.mxu0
    %131 = vmatprep.mubr.f32.mxu0 0.0
    %132 = vmatmul.mubr.f32.gmra.mxu0 %v52
    %v133 = vpop.f32.mrf.mxu0
    %v134 = vadd.f32 %v42, %v133
    %v135 = vpop.f32.mrf.mxu0
    %136 = vmatprep.mubr.f32.mxu0 0.0
    %137 = vmatmul.mubr.f32.gmra.mxu0 %v55
    %v138 = vpop.f32.mrf.mxu0
    %v139 = vadd.f32 %v42, %v138
    %v140 = vpop.f32.mrf.mxu0
    %141 = vdwg.mxu0
    %v142 = vld [vmem:[%s3] sm:$0xff]
    %v143 = vld [vmem:[%s3 + $0x8] sm:$0xff]
    %v144 = vld [vmem:[%s3 + $0x10] sm:$0xff]
    %v145 = vld [vmem:[%s3 + $0x18] sm:$0xff]
    %v146 = vld [vmem:[%s4] sm:$0x1]
    %v148 = vlaneseq
    %v149 = vshrl.u32 %v148, 7
    %v150 = vsub.s32 0, %v149
    %v151 = vrot.slane %v146, %v150
    %vm153 = vcmask 261120
    %v155 = vsel %vm153, %v124, 0
    %v158 = vsel %vm153, %v129, 0
    %v161 = vsel %vm153, %v134, 0
    %v164 = vsel %vm153, %v139, 0
    %166 = vmatprep.subr.mxu0 0.0
    %167 = vmatpush1.msra.mxu0 0.0
    %168 = vmatprep.subr.mxu0 0.0
    %169 = vmatpush1.msra.mxu0 0.0
    %170 = vmatprep.subr.mxu0 0.0
    %171 = vmatpush1.msra.mxu0 0.0
    %172 = vmatprep.subr.mxu0 0.0
    %173 = vmatpush1.msra.mxu0 0.0
    %174 = vmatprep.subr.mxu0 0.0
    %175 = vmatpush1.msra.mxu0 0.0
    %176 = vmatprep.subr.mxu0 0.0
    %177 = vmatpush1.msra.mxu0 0.0
    %178 = vmatprep.subr.mxu0 0.0
    %179 = vmatpush1.msra.mxu0 0.0
    %180 = vmatprep.subr.mxu0 0.0
    %181 = vmatpush1.msra.mxu0 0.0
    %182 = vmatprep.subr.mxu0 0.0
    %183 = vmatpush1.msra.mxu0 0.0
    %184 = vmatprep.subr.mxu0 0.0
    %185 = vmatpush1.msra.mxu0 0.0
    %186 = vmatprep.subr.mxu0 0.0
    %187 = vmatpush1.msra.mxu0 0.0
    %188 = vmatprep.subr.mxu0 0.0
    %189 = vmatpush1.msra.mxu0 0.0
    %190 = vmatprep.subr.mxu0 0.0
    %191 = vmatpush1.msra.mxu0 %v145
    %192 = vmatprep.subr.mxu0 0.0
    %193 = vmatpush1.msra.mxu0 %v144
    %194 = vmatprep.subr.mxu0 0.0
    %195 = vmatpush1.msra.mxu0 %v143
    %196 = vmatprep.subr.mxu0 0.0
    %197 = vmatpush1.msra.mxu0 %v142
    %198 = vmatprep.subr.mxu0 0.0
    %199 = vmatpush2.msra.mxu0 0.0
    %200 = vmatprep.subr.mxu0 0.0
    %201 = vmatpush2.msra.mxu0 0.0
    %202 = vmatprep.subr.mxu0 0.0
    %203 = vmatpush2.msra.mxu0 0.0
    %204 = vmatprep.subr.mxu0 0.0
    %205 = vmatpush2.msra.mxu0 0.0
    %206 = vmatprep.subr.mxu0 0.0
    %207 = vmatpush2.msra.mxu0 0.0
    %208 = vmatprep.subr.mxu0 0.0
    %209 = vmatpush2.msra.mxu0 0.0
    %210 = vmatprep.subr.mxu0 0.0
    %211 = vmatpush2.msra.mxu0 0.0
    %212 = vmatprep.subr.mxu0 0.0
    %213 = vmatpush2.msra.mxu0 0.0
    %214 = vmatprep.subr.mxu0 0.0
    %215 = vmatpush2.msra.mxu0 0.0
    %216 = vmatprep.subr.mxu0 0.0
    %217 = vmatpush2.msra.mxu0 0.0
    %218 = vmatprep.subr.mxu0 0.0
    %219 = vmatpush2.msra.mxu0 0.0
    %220 = vmatprep.subr.mxu0 0.0
    %221 = vmatpush2.msra.mxu0 0.0
    %222 = vmatprep.subr.mxu0 0.0
    %223 = vmatpush2.msra.mxu0 0.0
    %224 = vmatprep.subr.mxu0 0.0
    %225 = vmatpush2.msra.mxu0 0.0
    %226 = vmatprep.subr.mxu0 0.0
    %227 = vmatpush2.msra.mxu0 0.0
    %228 = vmatprep.subr.mxu0 0.0
    %229 = vmatpush2.msra.mxu0 0.0
    %230 = vmatprep.mubr.f32.mxu0 0.0
    %231 = vmatmul.mubr.f32.gmra.mxu0 %v155
    %v232 = vpop.f32.mrf.mxu0
    %v233 = vadd.f32 %v151, %v232
    %v234 = vpop.f32.mrf.mxu0
    %235 = vmatprep.mubr.f32.mxu0 0.0
    %236 = vmatmul.mubr.f32.gmra.mxu0 %v158
    %v237 = vpop.f32.mrf.mxu0
    %v238 = vadd.f32 %v151, %v237
    %v239 = vpop.f32.mrf.mxu0
    %240 = vmatprep.mubr.f32.mxu0 0.0
    %241 = vmatmul.mubr.f32.gmra.mxu0 %v161
    %v242 = vpop.f32.mrf.mxu0
    %v243 = vadd.f32 %v151, %v242
    %v244 = vpop.f32.mrf.mxu0
    %245 = vmatprep.mubr.f32.mxu0 0.0
    %246 = vmatmul.mubr.f32.gmra.mxu0 %v164
    %v247 = vpop.f32.mrf.mxu0
    %v248 = vadd.f32 %v151, %v247
    %v249 = vpop.f32.mrf.mxu0
    %250 = vdwg.mxu0
    %v251 = vld [vmem:[%s5] sm:$0xff]
    %v252 = vld [vmem:[%s5 + $0x8] sm:$0xff]
    %v253 = vld [vmem:[%s5 + $0x10] sm:$0xff]
    %v254 = vld [vmem:[%s5 + $0x18] sm:$0xff]
    %v255 = vld [vmem:[%s5 + $0x20] sm:$0xff]
    %v256 = vld [vmem:[%s5 + $0x28] sm:$0xff]
    %v257 = vld [vmem:[%s5 + $0x30] sm:$0xff]
    %v258 = vld [vmem:[%s5 + $0x38] sm:$0xff]
    %v259 = vld [vmem:[%s5 + $0x40] sm:$0xff]
    %v260 = vld [vmem:[%s5 + $0x48] sm:$0xff]
    %v261 = vld [vmem:[%s5 + $0x50] sm:$0xff]
    %v262 = vld [vmem:[%s5 + $0x58] sm:$0xff]
    %v263 = vld [vmem:[%s5 + $0x60] sm:$0xff]
    %v264 = vld [vmem:[%s5 + $0x68] sm:$0xff]
    %v265 = vld [vmem:[%s5 + $0x70] sm:$0xff]
    %v266 = vld [vmem:[%s5 + $0x78] sm:$0xff]
    %v268 = vsel %vm153, %v251, 0
    %v271 = vsel %vm153, %v252, 0
    %v274 = vsel %vm153, %v253, 0
    %v277 = vsel %vm153, %v254, 0
    %v280 = vsel %vm153, %v255, 0
    %v283 = vsel %vm153, %v256, 0
    %v286 = vsel %vm153, %v257, 0
    %v289 = vsel %vm153, %v258, 0
    %v292 = vsel %vm153, %v259, 0
    %v295 = vsel %vm153, %v260, 0
    %v298 = vsel %vm153, %v261, 0
    %v301 = vsel %vm153, %v262, 0
    %v304 = vsel %vm153, %v263, 0
    %v307 = vsel %vm153, %v264, 0
    %v310 = vsel %vm153, %v265, 0
    %v313 = vsel %vm153, %v266, 0
    %v316 = vsel %vm153, %v233, 0
    %v319 = vsel %vm153, %v238, 0
    %v322 = vsel %vm153, %v243, 0
    %v325 = vsel %vm153, %v248, 0
    %327 = vmatprep.subr.mxu0 0.0
    %328 = vmatpush1.xpose.msra.mxu0 0.0
    %329 = vmatprep.subr.mxu0 0.0
    %330 = vmatpush1.xpose.msra.mxu0 0.0
    %331 = vmatprep.subr.mxu0 0.0
    %332 = vmatpush1.xpose.msra.mxu0 0.0
    %333 = vmatprep.subr.mxu0 0.0
    %334 = vmatpush1.xpose.msra.mxu0 0.0
    %335 = vmatprep.subr.mxu0 0.0
    %336 = vmatpush1.xpose.msra.mxu0 0.0
    %337 = vmatprep.subr.mxu0 0.0
    %338 = vmatpush1.xpose.msra.mxu0 0.0
    %339 = vmatprep.subr.mxu0 0.0
    %340 = vmatpush1.xpose.msra.mxu0 0.0
    %341 = vmatprep.subr.mxu0 0.0
    %342 = vmatpush1.xpose.msra.mxu0 0.0
    %343 = vmatprep.subr.mxu0 0.0
    %344 = vmatpush1.xpose.msra.mxu0 0.0
    %345 = vmatprep.subr.mxu0 0.0
    %346 = vmatpush1.xpose.msra.mxu0 0.0
    %347 = vmatprep.subr.mxu0 0.0
    %348 = vmatpush1.xpose.msra.mxu0 0.0
    %349 = vmatprep.subr.mxu0 0.0
    %350 = vmatpush1.xpose.msra.mxu0 0.0
    %351 = vmatprep.subr.mxu0 0.0
    %352 = vmatpush1.xpose.msra.mxu0 %v325
    %353 = vmatprep.subr.mxu0 0.0
    %354 = vmatpush1.xpose.msra.mxu0 %v322
    %355 = vmatprep.subr.mxu0 0.0
    %356 = vmatpush1.xpose.msra.mxu0 %v319
    %357 = vmatprep.subr.mxu0 0.0
    %358 = vmatpush1.xpose.msra.mxu0 %v316
    %359 = vmatprep.subr.mxu0 0.0
    %360 = vmatpush2.xpose.msra.mxu0 0.0
    %361 = vmatprep.subr.mxu0 0.0
    %362 = vmatpush2.xpose.msra.mxu0 0.0
    %363 = vmatprep.subr.mxu0 0.0
    %364 = vmatpush2.xpose.msra.mxu0 0.0
    %365 = vmatprep.subr.mxu0 0.0
    %366 = vmatpush2.xpose.msra.mxu0 0.0
    %367 = vmatprep.subr.mxu0 0.0
    %368 = vmatpush2.xpose.msra.mxu0 0.0
    %369 = vmatprep.subr.mxu0 0.0
    %370 = vmatpush2.xpose.msra.mxu0 0.0
    %371 = vmatprep.subr.mxu0 0.0
    %372 = vmatpush2.xpose.msra.mxu0 0.0
    %373 = vmatprep.subr.mxu0 0.0
    %374 = vmatpush2.xpose.msra.mxu0 0.0
    %375 = vmatprep.subr.mxu0 0.0
    %376 = vmatpush2.xpose.msra.mxu0 0.0
    %377 = vmatprep.subr.mxu0 0.0
    %378 = vmatpush2.xpose.msra.mxu0 0.0
    %379 = vmatprep.subr.mxu0 0.0
    %380 = vmatpush2.xpose.msra.mxu0 0.0
    %381 = vmatprep.subr.mxu0 0.0
    %382 = vmatpush2.xpose.msra.mxu0 0.0
    %383 = vmatprep.subr.mxu0 0.0
    %384 = vmatpush2.xpose.msra.mxu0 0.0
    %385 = vmatprep.subr.mxu0 0.0
    %386 = vmatpush2.xpose.msra.mxu0 0.0
    %387 = vmatprep.subr.mxu0 0.0
    %388 = vmatpush2.xpose.msra.mxu0 0.0
    %389 = vmatprep.subr.mxu0 0.0
    %390 = vmatpush2.xpose.msra.mxu0 0.0
    %391 = vmatprep.mubr.f32.mxu0 0.0
    %392 = vmatmul.mubr.f32.gmra.mxu0 %v268
    %v393 = vpop.f32.mrf.mxu0
    %v394 = vadd.f32 0.0, %v393
    %v395 = vpop.f32.mrf.mxu0
    %396 = vmatprep.mubr.f32.mxu0 0.0
    %397 = vmatmul.mubr.f32.gmra.mxu0 %v271
    %v398 = vpop.f32.mrf.mxu0
    %v399 = vadd.f32 0.0, %v398
    %v400 = vpop.f32.mrf.mxu0
    %401 = vmatprep.mubr.f32.mxu0 0.0
    %402 = vmatmul.mubr.f32.gmra.mxu0 %v274
    %v403 = vpop.f32.mrf.mxu0
    %v404 = vadd.f32 0.0, %v403
    %v405 = vpop.f32.mrf.mxu0
    %406 = vmatprep.mubr.f32.mxu0 0.0
    %407 = vmatmul.mubr.f32.gmra.mxu0 %v277
    %v408 = vpop.f32.mrf.mxu0
    %v409 = vadd.f32 0.0, %v408
    %v410 = vpop.f32.mrf.mxu0
    %411 = vmatprep.mubr.f32.mxu0 0.0
    %412 = vmatmul.mubr.f32.gmra.mxu0 %v280
    %v413 = vpop.f32.mrf.mxu0
    %v414 = vadd.f32 0.0, %v413
    %v415 = vpop.f32.mrf.mxu0
    %416 = vmatprep.mubr.f32.mxu0 0.0
    %417 = vmatmul.mubr.f32.gmra.mxu0 %v283
    %v418 = vpop.f32.mrf.mxu0
    %v419 = vadd.f32 0.0, %v418
    %v420 = vpop.f32.mrf.mxu0
    %421 = vmatprep.mubr.f32.mxu0 0.0
    %422 = vmatmul.mubr.f32.gmra.mxu0 %v286
    %v423 = vpop.f32.mrf.mxu0
    %v424 = vadd.f32 0.0, %v423
    %v425 = vpop.f32.mrf.mxu0
    %426 = vmatprep.mubr.f32.mxu0 0.0
    %427 = vmatmul.mubr.f32.gmra.mxu0 %v289
    %v428 = vpop.f32.mrf.mxu0
    %v429 = vadd.f32 0.0, %v428
    %v430 = vpop.f32.mrf.mxu0
    %431 = vmatprep.mubr.f32.mxu0 0.0
    %432 = vmatmul.mubr.f32.gmra.mxu0 %v292
    %v433 = vpop.f32.mrf.mxu0
    %v434 = vadd.f32 0.0, %v433
    %v435 = vpop.f32.mrf.mxu0
    %436 = vmatprep.mubr.f32.mxu0 0.0
    %437 = vmatmul.mubr.f32.gmra.mxu0 %v295
    %v438 = vpop.f32.mrf.mxu0
    %v439 = vadd.f32 0.0, %v438
    %v440 = vpop.f32.mrf.mxu0
    %441 = vmatprep.mubr.f32.mxu0 0.0
    %442 = vmatmul.mubr.f32.gmra.mxu0 %v298
    %v443 = vpop.f32.mrf.mxu0
    %v444 = vadd.f32 0.0, %v443
    %v445 = vpop.f32.mrf.mxu0
    %446 = vmatprep.mubr.f32.mxu0 0.0
    %447 = vmatmul.mubr.f32.gmra.mxu0 %v301
    %v448 = vpop.f32.mrf.mxu0
    %v449 = vadd.f32 0.0, %v448
    %v450 = vpop.f32.mrf.mxu0
    %451 = vmatprep.mubr.f32.mxu0 0.0
    %452 = vmatmul.mubr.f32.gmra.mxu0 %v304
    %v453 = vpop.f32.mrf.mxu0
    %v454 = vadd.f32 0.0, %v453
    %v455 = vpop.f32.mrf.mxu0
    %456 = vmatprep.mubr.f32.mxu0 0.0
    %457 = vmatmul.mubr.f32.gmra.mxu0 %v307
    %v458 = vpop.f32.mrf.mxu0
    %v459 = vadd.f32 0.0, %v458
    %v460 = vpop.f32.mrf.mxu0
    %461 = vmatprep.mubr.f32.mxu0 0.0
    %462 = vmatmul.mubr.f32.gmra.mxu0 %v310
    %v463 = vpop.f32.mrf.mxu0
    %v464 = vadd.f32 0.0, %v463
    %v465 = vpop.f32.mrf.mxu0
    %466 = vmatprep.mubr.f32.mxu0 0.0
    %467 = vmatmul.mubr.f32.gmra.mxu0 %v313
    %v468 = vpop.f32.mrf.mxu0
    %v469 = vadd.f32 0.0, %v468
    %v470 = vpop.f32.mrf.mxu0
    %471 = vdwg.mxu0
    %v472 = vld [vmem:[%s6] sm:$0xff]
    %v473 = vld [vmem:[%s6 + $0x8] sm:$0xff]
    %v474 = vld [vmem:[%s6 + $0x10] sm:$0xff]
    %v475 = vld [vmem:[%s6 + $0x18] sm:$0xff]
    %v476 = vld [vmem:[%s6 + $0x20] sm:$0xff]
    %v477 = vld [vmem:[%s6 + $0x28] sm:$0xff]
    %v478 = vld [vmem:[%s6 + $0x30] sm:$0xff]
    %v479 = vld [vmem:[%s6 + $0x38] sm:$0xff]
    %v480 = vld [vmem:[%s6 + $0x40] sm:$0xff]
    %v481 = vld [vmem:[%s6 + $0x48] sm:$0xff]
    %v482 = vld [vmem:[%s6 + $0x50] sm:$0xff]
    %v483 = vld [vmem:[%s6 + $0x58] sm:$0xff]
    %v484 = vld [vmem:[%s6 + $0x60] sm:$0xff]
    %v485 = vld [vmem:[%s6 + $0x68] sm:$0xff]
    %v486 = vld [vmem:[%s6 + $0x70] sm:$0xff]
    %v487 = vld [vmem:[%s6 + $0x78] sm:$0xff]
    %v488 = vmul.f32 %v394, 2.0
    %v489 = vmul.f32 %v399, 2.0
    %v490 = vmul.f32 %v404, 2.0
    %v491 = vmul.f32 %v409, 2.0
    %v492 = vmul.f32 %v414, 2.0
    %v493 = vmul.f32 %v419, 2.0
    %v494 = vmul.f32 %v424, 2.0
    %v495 = vmul.f32 %v429, 2.0
    %v496 = vmul.f32 %v434, 2.0
    %v497 = vmul.f32 %v439, 2.0
    %v498 = vmul.f32 %v444, 2.0
    %v499 = vmul.f32 %v449, 2.0
    %v500 = vmul.f32 %v454, 2.0
    %v501 = vmul.f32 %v459, 2.0
    %v502 = vmul.f32 %v464, 2.0
    %v503 = vmul.f32 %v469, 2.0
    %505 = vset.pattern.permute.xlu0 0
    %506 = vperm.xlu0 %505, %v472
    %v507 = vpop.permute.xlu0 %506
    %510 = vset.pattern.permute.xlu0 0
    %511 = vperm.xlu0 %510, %v473
    %v512 = vpop.permute.xlu0 %511
    %515 = vset.pattern.permute.xlu0 0
    %516 = vperm.xlu0 %515, %v474
    %v517 = vpop.permute.xlu0 %516
    %520 = vset.pattern.permute.xlu0 0
    %521 = vperm.xlu0 %520, %v475
    %v522 = vpop.permute.xlu0 %521
    %525 = vset.pattern.permute.xlu0 0
    %526 = vperm.xlu0 %525, %v476
    %v527 = vpop.permute.xlu0 %526
    %530 = vset.pattern.permute.xlu0 0
    %531 = vperm.xlu0 %530, %v477
    %v532 = vpop.permute.xlu0 %531
    %535 = vset.pattern.permute.xlu0 0
    %536 = vperm.xlu0 %535, %v478
    %v537 = vpop.permute.xlu0 %536
    %540 = vset.pattern.permute.xlu0 0
    %541 = vperm.xlu0 %540, %v479
    %v542 = vpop.permute.xlu0 %541
    %545 = vset.pattern.permute.xlu0 0
    %546 = vperm.xlu0 %545, %v480
    %v547 = vpop.permute.xlu0 %546
    %550 = vset.pattern.permute.xlu0 0
    %551 = vperm.xlu0 %550, %v481
    %v552 = vpop.permute.xlu0 %551
    %555 = vset.pattern.permute.xlu0 0
    %556 = vperm.xlu0 %555, %v482
    %v557 = vpop.permute.xlu0 %556
    %560 = vset.pattern.permute.xlu0 0
    %561 = vperm.xlu0 %560, %v483
    %v562 = vpop.permute.xlu0 %561
    %565 = vset.pattern.permute.xlu0 0
    %566 = vperm.xlu0 %565, %v484
    %v567 = vpop.permute.xlu0 %566
    %570 = vset.pattern.permute.xlu0 0
    %571 = vperm.xlu0 %570, %v485
    %v572 = vpop.permute.xlu0 %571
    %575 = vset.pattern.permute.xlu0 0
    %576 = vperm.xlu0 %575, %v486
    %v577 = vpop.permute.xlu0 %576
    %580 = vset.pattern.permute.xlu0 0
    %581 = vperm.xlu0 %580, %v487
    %v582 = vpop.permute.xlu0 %581
    %v584 = vsub.f32 %v507, %v488
    %v585 = vsub.f32 %v512, %v489
    %v586 = vsub.f32 %v517, %v490
    %v587 = vsub.f32 %v522, %v491
    %v588 = vsub.f32 %v527, %v492
    %v589 = vsub.f32 %v532, %v493
    %v590 = vsub.f32 %v537, %v494
    %v591 = vsub.f32 %v542, %v495
    %v592 = vsub.f32 %v547, %v496
    %v593 = vsub.f32 %v552, %v497
    %v594 = vsub.f32 %v557, %v498
    %v595 = vsub.f32 %v562, %v499
    %v596 = vsub.f32 %v567, %v500
    %v597 = vsub.f32 %v572, %v501
    %v598 = vsub.f32 %v577, %v502
    %v599 = vsub.f32 %v582, %v503
    %v600 = vlaneseq
    %v601 = vshrl.u32 %v600, 7
    %v602 = vadd.s32 %v601, 8
    %v603 = vadd.s32 %v601, 16
    %v604 = vadd.s32 %v601, 24
    %v605 = vadd.s32 %v601, 32
    %v606 = vadd.s32 %v601, 40
    %v607 = vadd.s32 %v601, 48
    %v608 = vadd.s32 %v601, 56
    %v609 = vadd.s32 %v601, 64
    %v610 = vadd.s32 %v601, 72
    %v611 = vadd.s32 %v601, 80
    %v612 = vadd.s32 %v601, 88
    %v613 = vadd.s32 %v601, 96
    %v614 = vadd.s32 %v601, 104
    %v615 = vadd.s32 %v601, 112
    %v616 = vadd.s32 %v601, 120
    %v617 = vsel %vm153, %v584, inf
    %v618 = vsel %vm153, %v585, inf
    %v619 = vsel %vm153, %v586, inf
    %v620 = vsel %vm153, %v587, inf
    %v621 = vsel %vm153, %v588, inf
    %v622 = vmin.f32 %v617, %v621
    %v623 = vsel %vm153, %v589, inf
    %v624 = vmin.f32 %v618, %v623
    %v625 = vsel %vm153, %v590, inf
    %v626 = vmin.f32 %v619, %v625
    %v627 = vsel %vm153, %v591, inf
    %v628 = vmin.f32 %v620, %v627
    %v629 = vsel %vm153, %v592, inf
    %v630 = vmin.f32 %v622, %v629
    %v631 = vsel %vm153, %v593, inf
    %v632 = vmin.f32 %v624, %v631
    %v633 = vsel %vm153, %v594, inf
    %v634 = vmin.f32 %v626, %v633
    %v635 = vsel %vm153, %v595, inf
    %v636 = vmin.f32 %v628, %v635
    %v637 = vsel %vm153, %v596, inf
    %v638 = vmin.f32 %v630, %v637
    %v639 = vsel %vm153, %v597, inf
    %v640 = vmin.f32 %v632, %v639
    %v641 = vsel %vm153, %v598, inf
    %v642 = vmin.f32 %v634, %v641
    %v643 = vsel %vm153, %v599, inf
    %v644 = vmin.f32 %v636, %v643
    %v645 = vmin.f32 %v638, %v640
    %v646 = vmin.f32 %v642, %v644
    %v647 = vmin.f32 %v645, %v646
    %v648 = vrot.slane %v647, 4
    %v649 = vmin.f32 %v647, %v648
    %v650 = vrot.slane %v649, 2
    %v651 = vmin.f32 %v649, %v650
    %v652 = vrot.slane %v651, 1
    %v653 = vmin.f32 %v651, %v652
    %vm654 = vcmp.le.f32.partialorder %v584, %v653
    %vm655 = vcmp.le.f32.partialorder %v585, %v653
    %vm656 = vcmp.le.f32.partialorder %v586, %v653
    %vm657 = vcmp.le.f32.partialorder %v587, %v653
    %vm658 = vcmp.le.f32.partialorder %v588, %v653
    %vm659 = vcmp.le.f32.partialorder %v589, %v653
    %vm660 = vcmp.le.f32.partialorder %v590, %v653
    %vm661 = vcmp.le.f32.partialorder %v591, %v653
    %vm662 = vcmp.le.f32.partialorder %v592, %v653
    %vm663 = vcmp.le.f32.partialorder %v593, %v653
    %vm664 = vcmp.le.f32.partialorder %v594, %v653
    %vm665 = vcmp.le.f32.partialorder %v595, %v653
    %vm666 = vcmp.le.f32.partialorder %v596, %v653
    %vm667 = vcmp.le.f32.partialorder %v597, %v653
    %vm668 = vcmp.le.f32.partialorder %v598, %v653
    %vm669 = vcmp.le.f32.partialorder %v599, %v653
    %v670 = vsel %vm654, %v601, 128
    %v671 = vsel %vm655, %v602, 128
    %v672 = vsel %vm656, %v603, 128
    %v673 = vsel %vm657, %v604, 128
    %v674 = vsel %vm658, %v605, 128
    %v675 = vsel %vm659, %v606, 128
    %v676 = vsel %vm660, %v607, 128
    %v677 = vsel %vm661, %v608, 128
    %v678 = vsel %vm662, %v609, 128
    %v679 = vsel %vm663, %v610, 128
    %v680 = vsel %vm664, %v611, 128
    %v681 = vsel %vm665, %v612, 128
    %v682 = vsel %vm666, %v613, 128
    %v683 = vsel %vm667, %v614, 128
    %v684 = vsel %vm668, %v615, 128
    %v685 = vsel %vm669, %v616, 128
    %v686 = vsel %vm153, %v670, 2147483647
    %v687 = vsel %vm153, %v671, 2147483647
    %v688 = vsel %vm153, %v672, 2147483647
    %v689 = vsel %vm153, %v673, 2147483647
    %v690 = vsel %vm153, %v674, 2147483647
    %vm691 = vcmp.lt.s32.totalorder %v686, %v690
    %v692 = vsel %vm691, %v686, %v690
    %v693 = vsel %vm153, %v675, 2147483647
    %vm694 = vcmp.lt.s32.totalorder %v687, %v693
    %v695 = vsel %vm694, %v687, %v693
    %v696 = vsel %vm153, %v676, 2147483647
    %vm697 = vcmp.lt.s32.totalorder %v688, %v696
    %v698 = vsel %vm697, %v688, %v696
    %v699 = vsel %vm153, %v677, 2147483647
    %vm700 = vcmp.lt.s32.totalorder %v689, %v699
    %v701 = vsel %vm700, %v689, %v699
    %v702 = vsel %vm153, %v678, 2147483647
    %vm703 = vcmp.lt.s32.totalorder %v692, %v702
    %v704 = vsel %vm703, %v692, %v702
    %v705 = vsel %vm153, %v679, 2147483647
    %vm706 = vcmp.lt.s32.totalorder %v695, %v705
    %v707 = vsel %vm706, %v695, %v705
    %v708 = vsel %vm153, %v680, 2147483647
    %vm709 = vcmp.lt.s32.totalorder %v698, %v708
    %v710 = vsel %vm709, %v698, %v708
    %v711 = vsel %vm153, %v681, 2147483647
    %vm712 = vcmp.lt.s32.totalorder %v701, %v711
    %v713 = vsel %vm712, %v701, %v711
    %v714 = vsel %vm153, %v682, 2147483647
    %vm715 = vcmp.lt.s32.totalorder %v704, %v714
    %v716 = vsel %vm715, %v704, %v714
    %v717 = vsel %vm153, %v683, 2147483647
    %vm718 = vcmp.lt.s32.totalorder %v707, %v717
    %v719 = vsel %vm718, %v707, %v717
    %v720 = vsel %vm153, %v684, 2147483647
    %vm721 = vcmp.lt.s32.totalorder %v710, %v720
    %v722 = vsel %vm721, %v710, %v720
    %v723 = vsel %vm153, %v685, 2147483647
    %vm724 = vcmp.lt.s32.totalorder %v713, %v723
    %v725 = vsel %vm724, %v713, %v723
    %vm726 = vcmp.lt.s32.totalorder %v716, %v719
    %v727 = vsel %vm726, %v716, %v719
    %vm728 = vcmp.lt.s32.totalorder %v722, %v725
    %v729 = vsel %vm728, %v722, %v725
    %vm730 = vcmp.lt.s32.totalorder %v727, %v729
    %v731 = vsel %vm730, %v727, %v729
    %v732 = vrot.slane %v731, 4
    %vm733 = vcmp.lt.s32.totalorder %v731, %v732
    %v734 = vsel %vm733, %v731, %v732
    %v735 = vrot.slane %v734, 2
    %vm736 = vcmp.lt.s32.totalorder %v734, %v735
    %v737 = vsel %vm736, %v734, %v735
    %v738 = vrot.slane %v737, 1
    %vm739 = vcmp.lt.s32.totalorder %v737, %v738
    %v740 = vsel %vm739, %v737, %v738
    %vm741 = vcmask 253952
    %742 = vst.msk [vmem:[#allocation2] sm:$0x1] %vm741, %v740
    // Predicated region
    $region30: #{tpu_custom_call.1} parent=1 // pred_check
      _
    $region31: #{tpu_custom_call.1} parent=1 // pred_check_branch
      %744 = sbr.rel (0) target = $region33
    $region32: #{tpu_custom_call.1} parent=1 // pred_region
      %s746 = ssub.s32 16, 16
      %747 = vsyncadd [#allocation3], %s746
      %s749 = sshll.u32 [#allocation2], 4
      %s750 = int_to_ptr.vmem [resolvable:$true] %s749
      %752 = dma.vmem_to_hbm [thread:$0]  %s750, 16, %s7, [#allocation3]
    $region33: #{tpu_custom_call.1} parent=1 // pred_fallthru
      _
    // Predicated region
    $region34: #{tpu_custom_call.1} parent=1 // pred_check
      _
    $region35: #{tpu_custom_call.1} parent=1 // pred_check_branch
      %754 = sbr.rel (0) target = $region37
    $region36: #{tpu_custom_call.1} parent=1 // pred_region
      %755 = dma.done [#allocation3], 16
    $region37: #{tpu_custom_call.1} parent=1 // pred_fallthru
      _
    %756 = vsyncpa [#allocation3], 1

</llo_original>
